<compile_context>
chip_gen: v7x
topology: tpu7x:2x2x1
jax: 0.10.0
libtpu: 0.0.40
codegen_flags: <defaults>
</compile_context>

<pallas_src>
import functools

import jax
import jax.numpy as jnp
from jax import lax
from jax.experimental import pallas as pl
from jax.experimental.pallas import tpu as pltpu


_DEFAULT_MAX_BLOCK_BYTES = 2 * 1024 * 1024   # per-block cap (~6x lives in VMEM)
_VMEM_LIMIT_BYTES = 32 * 1024 * 1024         # safe headroom on v5e / v6e / v7x
_LANE = 128


def _ln2d_whole_sample_kernel(x_ref, scale_ref, offset_ref, o_ref, *, n_elems):
    """One grid step == one sample; x block (1, Cf, HWf) resident in VMEM."""
    x = x_ref[...].astype(jnp.float32)                        # (1, Cf, HWf)
    n = jnp.float32(n_elems)
    s = jnp.sum(x, axis=(1, 2), keepdims=True)                # (1, 1, 1)
    ss = jnp.sum(x * x, axis=(1, 2), keepdims=True)
    mean = s / n
    var = (ss - n * mean * mean) / (n - 1.0)                  # unbiased (torch.std)
    rstd = lax.rsqrt(var)
    scale = scale_ref[...].astype(jnp.float32)                # (1, Cf, 1)
    offset = offset_ref[...].astype(jnp.float32)
    a = scale * rstd                                          # (1, Cf, 1)
    b = offset - a * mean
    o_ref[...] = (a * x + b).astype(o_ref.dtype)


def _ln2d_tiled_kernel(x_ref, scale_ref, offset_ref, o_ref,
                       sum_ref, sumsq_ref, *, n_elems):
    """grid = (N, 2 phases, n_chunks): phase 0 -> stats, phase 1 -> a*x + b."""
    phase = pl.program_id(1)
    chunk = pl.program_id(2)

    @pl.when(phase == 0)
    def _stats():
        @pl.when(chunk == 0)
        def _init():
            sum_ref[...] = jnp.zeros_like(sum_ref)
            sumsq_ref[...] = jnp.zeros_like(sumsq_ref)
        x = x_ref[...].astype(jnp.float32)                    # (1, Cf, THW)
        sum_ref[...] += jnp.sum(x, axis=(1, 2), keepdims=True)
        sumsq_ref[...] += jnp.sum(x * x, axis=(1, 2), keepdims=True)

    @pl.when(phase == 1)
    def _normalize():
        x = x_ref[...].astype(jnp.float32)
        n = jnp.float32(n_elems)
        mean = sum_ref[...] / n                               # (1, 1, 1)
        var = (sumsq_ref[...] - n * mean * mean) / (n - 1.0)
        rstd = lax.rsqrt(var)
        scale = scale_ref[...].astype(jnp.float32)            # (1, Cf, 1)
        offset = offset_ref[...].astype(jnp.float32)
        a = scale * rstd
        b = offset - a * mean
        o_ref[...] = (a * x + b).astype(o_ref.dtype)


def _choose_fold(C, HW, itemsize):
    """Fold factor r: (N, C, HW) -> (N, C*r, HW//r) for sublane/lane density."""
    sublane = (8 * 4) // itemsize       # 8 for f32, 16 for bf16, 32 for int8
    limit = min(HW, 512)
    for r in range(1, limit + 1):       # sublane-dense AND lane-dense
        if HW % r == 0 and (C * r) % sublane == 0 and (HW // r) % _LANE == 0:
            return r
    for r in range(1, limit + 1):       # sublane-dense only
        if HW % r == 0 and (C * r) % sublane == 0:
            return r
    return 1


def my_layernorm2d(x, scale, offset, *, max_block_bytes=_DEFAULT_MAX_BLOCK_BYTES):
    """x: (N, C, H, W); scale/offset: (1, C, 1, 1).  Returns (N, C, H, W)."""
    N, C, H, W = x.shape
    HW = H * W
    n_elems = C * HW
    itemsize = jnp.dtype(x.dtype).itemsize

    r = _choose_fold(C, HW, itemsize)
    Cf, HWf = C * r, HW // r

    x3 = x.reshape(N, Cf, HWf)
    # Folded row c*r + j holds elements of original channel c.
    scale3 = jnp.repeat(scale.reshape(C), r).reshape(1, Cf, 1)
    offset3 = jnp.repeat(offset.reshape(C), r).reshape(1, Cf, 1)

    sample_bytes = Cf * HWf * itemsize

    if sample_bytes <= max_block_bytes:
        # Whole-sample fast path: each element read once / written once.
        out3 = pl.pallas_call(
            functools.partial(_ln2d_whole_sample_kernel, n_elems=n_elems),
            out_shape=jax.ShapeDtypeStruct((N, Cf, HWf), x.dtype),
            grid_spec=pltpu.PrefetchScalarGridSpec(
                num_scalar_prefetch=0,
                grid=(N,),
                in_specs=[
                    pl.BlockSpec((1, Cf, HWf), lambda b: (b, 0, 0)),
                    pl.BlockSpec((1, Cf, 1), lambda b: (0, 0, 0)),
                    pl.BlockSpec((1, Cf, 1), lambda b: (0, 0, 0)),
                ],
                out_specs=pl.BlockSpec((1, Cf, HWf), lambda b: (b, 0, 0)),
            ),
            compiler_params=pltpu.CompilerParams(
                dimension_semantics=("parallel",),
                vmem_limit_bytes=_VMEM_LIMIT_BYTES,
            ),
        )(x3, scale3, offset3)
        return out3.reshape(N, C, H, W)

    # Two-phase tiled path: chunk the folded spatial axis in lane-dense
    # (multiple-of-128) pieces that fit the block budget.
    thw = 0
    d = _LANE
    while d <= HWf:
        if HWf % d == 0 and Cf * d * itemsize <= max_block_bytes:
            thw = d
        d += _LANE
    if thw == 0 and HWf % _LANE == 0:
        thw = _LANE
    if thw == 0:
        # TODO(synk): spatial sizes with no multiple-of-128 divisor fall back to
        # whole-sample blocks (may exceed the VMEM budget for very large C*H*W).
        thw = HWf
    num_chunks = HWf // thw

    out3 = pl.pallas_call(
        functools.partial(_ln2d_tiled_kernel, n_elems=n_elems),
        out_shape=jax.ShapeDtypeStruct((N, Cf, HWf), x.dtype),
        grid_spec=pltpu.PrefetchScalarGridSpec(
            num_scalar_prefetch=0,
            grid=(N, 2, num_chunks),
            in_specs=[
                pl.BlockSpec((1, Cf, thw), lambda b, p, c: (b, 0, c)),
                pl.BlockSpec((1, Cf, 1), lambda b, p, c: (0, 0, 0)),
                pl.BlockSpec((1, Cf, 1), lambda b, p, c: (0, 0, 0)),
            ],
            # p*c pins the output block to chunk 0 during the stats phase so
            # each output block is DMA'd back to HBM exactly once, with the
            # data written in phase 1.
            out_specs=pl.BlockSpec((1, Cf, thw), lambda b, p, c: (b, 0, p * c)),
            scratch_shapes=[
                pltpu.VMEM((1, 1, 1), jnp.float32),   # running sum
                pltpu.VMEM((1, 1, 1), jnp.float32),   # running sum of squares
            ],
        ),
        compiler_params=pltpu.CompilerParams(
            dimension_semantics=("parallel", "arbitrary", "arbitrary"),
            vmem_limit_bytes=_VMEM_LIMIT_BYTES,
        ),
    )(x3, scale3, offset3)
    return out3.reshape(N, C, H, W)


def _reference(x, scale, offset):
    # Pure-JAX reference matching torch semantics (unbiased std, no eps).
    n = x.shape[1] * x.shape[2] * x.shape[3]
    mean = jnp.mean(x, axis=(1, 2, 3), keepdims=True)
    var = jnp.sum((x - mean) ** 2, axis=(1, 2, 3), keepdims=True) / (n - 1)
    return scale * ((x - mean) / jnp.sqrt(var)) + offset


if __name__ == "__main__":
    key = jax.random.PRNGKey(0)
    k1, k2, k3, k4 = jax.random.split(key, 4)

    # Test 1: demo shape with module-default parameters (ones / zeros).
    N, C, H, W = 2, 4, 16, 16
    x = jax.random.normal(k1, (N, C, H, W), dtype=jnp.float32)
    scale = jnp.ones((1, C, 1, 1), dtype=jnp.float32)
    offset = jnp.zeros((1, C, 1, 1), dtype=jnp.float32)
    out = jax.block_until_ready(my_layernorm2d(x, scale, offset))
    ref = _reference(x, scale, offset)
    assert out.shape == (N, C, H, W)
    assert jnp.allclose(out, ref, atol=1e-4, rtol=1e-4), "whole-sample path mismatch"

    # Test 2: non-trivial affine params; exercise both the whole-sample path
    # and (by forcing a small block budget) the two-phase tiled path.
    N2, C2, H2, W2 = 2, 8, 32, 32
    x2 = jax.random.normal(k2, (N2, C2, H2, W2), dtype=jnp.float32)
    s2 = 1.0 + 0.1 * jax.random.normal(k3, (1, C2, 1, 1), dtype=jnp.float32)
    o2 = 0.1 * jax.random.normal(k4, (1, C2, 1, 1), dtype=jnp.float32)
    ref2 = _reference(x2, s2, o2)
    out2a = jax.block_until_ready(my_layernorm2d(x2, s2, o2))
    out2b = jax.block_until_ready(
        my_layernorm2d(x2, s2, o2, max_block_bytes=8192))    # forces tiled path
    assert jnp.allclose(out2a, ref2, atol=1e-4, rtol=1e-4), "whole-sample path mismatch"
    assert jnp.allclose(out2b, ref2, atol=1e-4, rtol=1e-4), "tiled path mismatch"

    print("KERNEL_OK")
</pallas_src>

<mosaic_0001>
module attributes {stable_mosaic.version = 11 : i64} {
  func.func @_ln2d_whole_sample_kernel(%arg0: i32, %arg1: memref<1x8x128xf32, #tpu.memory_space<vmem>>, %arg2: memref<1x8x1xf32, #tpu.memory_space<vmem>>, %arg3: memref<1x8x1xf32, #tpu.memory_space<vmem>>, %arg4: memref<1x8x128xf32, #tpu.memory_space<vmem>>) attributes {dimension_semantics = [#tpu.dimension_semantics<parallel>], iteration_bounds = array<i64: 2>, scalar_prefetch = 0 : i64, scratch_operands = 0 : i64, tpu.core_type = #tpu.core_type<tc>, window_params = [{transform_indices = @transform_0, window_bounds = array<i64: 1, 8, 128>}, {pipeline_mode = #tpu.pipeline_mode<synchronous>, transform_indices = @transform_1, window_bounds = array<i64: 1, 8, 1>}, {pipeline_mode = #tpu.pipeline_mode<synchronous>, transform_indices = @transform_2, window_bounds = array<i64: 1, 8, 1>}, {transform_indices = @transform_3, window_bounds = array<i64: 1, 8, 128>}]} {
    %c0 = arith.constant 0 : index
    %c0_0 = arith.constant 0 : index
    %c0_1 = arith.constant 0 : index
    %0 = vector.load %arg1[%c0, %c0_0, %c0_1] : memref<1x8x128xf32, #tpu.memory_space<vmem>>, vector<1x8x128xf32>
    %cst = arith.constant dense<0.000000e+00> : vector<1xf32>
    %1 = vector.multi_reduction <add>, %0, %cst [1, 2] : vector<1x8x128xf32> to vector<1xf32>
    %2 = vector.shape_cast %1 : vector<1xf32> to vector<1x1x1xf32>
    %3 = arith.mulf %0, %0 : vector<1x8x128xf32>
    %cst_2 = arith.constant dense<0.000000e+00> : vector<1xf32>
    %4 = vector.multi_reduction <add>, %3, %cst_2 [1, 2] : vector<1x8x128xf32> to vector<1xf32>
    %5 = vector.shape_cast %4 : vector<1xf32> to vector<1x1x1xf32>
    %cst_3 = arith.constant 1.024000e+03 : f32
    %6 = vector.broadcast %cst_3 : f32 to vector<1x1x1xf32>
    %7 = arith.divf %2, %6 : vector<1x1x1xf32>
    %cst_4 = arith.constant 1.024000e+03 : f32
    %8 = vector.broadcast %cst_4 : f32 to vector<1x1x1xf32>
    %9 = arith.mulf %8, %7 : vector<1x1x1xf32>
    %10 = arith.mulf %9, %7 : vector<1x1x1xf32>
    %11 = arith.subf %5, %10 : vector<1x1x1xf32>
    %cst_5 = arith.constant 1.024000e+03 : f32
    %cst_6 = arith.constant 1.000000e+00 : f32
    %12 = arith.subf %cst_5, %cst_6 : f32
    %13 = vector.broadcast %12 : f32 to vector<1x1x1xf32>
    %14 = arith.divf %11, %13 : vector<1x1x1xf32>
    %15 = math.rsqrt %14 : vector<1x1x1xf32>
    %c0_7 = arith.constant 0 : index
    %c0_8 = arith.constant 0 : index
    %c0_9 = arith.constant 0 : index
    %16 = vector.load %arg2[%c0_7, %c0_8, %c0_9] : memref<1x8x1xf32, #tpu.memory_space<vmem>>, vector<1x8x1xf32>
    %c0_10 = arith.constant 0 : index
    %c0_11 = arith.constant 0 : index
    %c0_12 = arith.constant 0 : index
    %17 = vector.load %arg3[%c0_10, %c0_11, %c0_12] : memref<1x8x1xf32, #tpu.memory_space<vmem>>, vector<1x8x1xf32>
    %18 = vector.broadcast %15 : vector<1x1x1xf32> to vector<1x8x1xf32>
    %19 = arith.mulf %16, %18 : vector<1x8x1xf32>
    %20 = vector.broadcast %7 : vector<1x1x1xf32> to vector<1x8x1xf32>
    %21 = arith.mulf %19, %20 : vector<1x8x1xf32>
    %22 = arith.subf %17, %21 : vector<1x8x1xf32>
    %23 = vector.broadcast %19 : vector<1x8x1xf32> to vector<1x8x128xf32>
    %24 = arith.mulf %23, %0 : vector<1x8x128xf32>
    %25 = vector.broadcast %22 : vector<1x8x1xf32> to vector<1x8x128xf32>
    %26 = arith.addf %24, %25 : vector<1x8x128xf32>
    %c0_13 = arith.constant 0 : index
    %c0_14 = arith.constant 0 : index
    %c0_15 = arith.constant 0 : index
    %27 = vector.load %arg4[%c0_13, %c0_14, %c0_15] : memref<1x8x128xf32, #tpu.memory_space<vmem>>, vector<1x8x128xf32>
    tpu.vector_store %arg4[%c0_13, %c0_14, %c0_15], %26 {strides = array<i32>} : memref<1x8x128xf32, #tpu.memory_space<vmem>>, vector<1x8x128xf32>,
    return
  }
  func.func @transform_0(%arg0: i32) -> (i32, i32, i32) {
    %c0_i32 = arith.constant 0 : i32
    %c0_i32_0 = arith.constant 0 : i32
    %c0_i32_1 = arith.constant 0 : i32
    return %arg0, %c0_i32, %c0_i32_0 : i32, i32, i32
  }
  func.func @transform_1(%arg0: i32) -> (i32, i32, i32) {
    %c0_i32 = arith.constant 0 : i32
    %c0_i32_0 = arith.constant 0 : i32
    %c0_i32_1 = arith.constant 0 : i32
    %c0_i32_2 = arith.constant 0 : i32
    return %c0_i32, %c0_i32_0, %c0_i32_1 : i32, i32, i32
  }
  func.func @transform_2(%arg0: i32) -> (i32, i32, i32) {
    %c0_i32 = arith.constant 0 : i32
    %c0_i32_0 = arith.constant 0 : i32
    %c0_i32_1 = arith.constant 0 : i32
    %c0_i32_2 = arith.constant 0 : i32
    return %c0_i32, %c0_i32_0, %c0_i32_1 : i32, i32, i32
  }
  func.func @transform_3(%arg0: i32) -> (i32, i32, i32) {
    %c0_i32 = arith.constant 0 : i32
    %c0_i32_0 = arith.constant 0 : i32
    %c0_i32_1 = arith.constant 0 : i32
    return %arg0, %c0_i32, %c0_i32_0 : i32, i32, i32
  }
}

</mosaic_0001>

<llo_original>
// kernel: tpu_custom_call.1
$region0: #{tpu_custom_call.1}
  #allocation0 [shape = 'u32[]', space=smem, size = 0x4, offset = 0x4, fixed_abs, tag = 'smem constant byte address 0x4 - core index']
  #allocation1 [shape = 'u32[144,128]{1,0:T(1,128)}', space=vmem, size = 0x12000, scoped, tag = 'internal scratch']
  %s0 = inlined_call_operand.vmem [shape: f32[2,8,128], index: 0, kind: input, shape index: {}]
  %s1 = inlined_call_operand.vmem [shape: f32[1,8,1], index: 1, kind: input, shape index: {}]
  %s2 = inlined_call_operand.vmem [shape: f32[1,8,1], index: 2, kind: input, shape index: {}]
  %s3 = inlined_call_operand.hbm [shape: f32[2,8,128], index: 3, kind: output, shape index: {}]
  %s4 = sld [smem:[#allocation0]]
  $region45: #{tpu_custom_call.1} parent=0
    _
  %s6 = ssub.s32 1, %s4
  %s7 = scalar_select 0, %s6, %s4
  $region1: #{tpu_custom_call.1} parent=0
    #allocation2 [shape = 'u8[8192]{0}', space=vmem, size = 0x2000, scoped, tag = 'output window, operand 0']
    #allocation3 [shape = 's32[2]{0}', space=sflag, size = 0x8, scoped, tag = 'scoped memory for tpu_custom_call.1']
    %8 = vsyncpa [#allocation3], 0
    %s9 = scalar_lea.sflag [#allocation3], 1
    %10 = vsyncpa %s9, 0
    loop: start=0, step=1, limit=4
    $region2: #{tpu_custom_call.1} parent=1 // loop_pre_header
      _
    $region3: #{tpu_custom_call.1} parent=1 // loop_header
      %s12 = sphi 0, %s16
      %p13 = scmp.ge.s32.totalorder %s12, 4
      %s22 = sphi 0, %s24
      %s25 = sphi 0, %s22
      %s26 = sphi 0, %s25
      %s42 = sphi 0, %s26
      %s46 = sphi 0, %s46
      %s48 = sphi 0, %s46
      %s49 = sphi 0, %s48
      %s63 = sphi 0, %s49
      %s67 = sphi 0, %s67
      %s69 = sphi 0, %s67
      %s70 = sphi 0, %s69
      %s84 = sphi 0, %s70
      %s90 = sphi 0, %s92
      %s93 = sphi 0, %s90
      %s94 = sphi 0, %s93
      %s110 = sphi 0, %s94
    $region4: #{tpu_custom_call.1} parent=1 // loop_header_branch
      %15 = sbr.rel (%p13) target = $region8
    $region5: #{tpu_custom_call.1} parent=1 // loop_body
      %s17 = ssub.s32 %s12, 1
      %s18 = ssub.s32 %s12, 2
      %s19 = sadd.s32 %s12, 1
      %s20 = ssub.s32 %s12, %s19
      %p21 = scmp.eq.s32.totalorder %s20, 0
      %s23 = sadd.s32 %s22, 1
      %s24 = scalar_select %p21, %s22, %s23
      %p27 = pneg %p21
      %p28 = scmp.eq.s32.totalorder %s12, 1
      %p29 = por %p27, %p28
      %p30 = scmp.ne.s32.totalorder %s22, %s25
      %p31 = scmp.eq.s32.totalorder %s12, 0
      %p32 = por %p30, %p31
      %p33 = scmp.ne.s32.totalorder %s22, %s25
      %p34 = scmp.eq.s32.totalorder %s17, 1
      %p35 = por %p33, %p34
      %p36 = scmp.ne.s32.totalorder %s25, %s26
      %p37 = scmp.eq.s32.totalorder %s17, 0
      %p38 = por %p36, %p37
      %p39 = scmp.ne.s32.totalorder %s25, %s26
      %p40 = scmp.eq.s32.totalorder %s18, 1
      %p41 = por %p39, %p40
      %p43 = scmp.ne.s32.totalorder %s26, %s42
      %p44 = scmp.eq.s32.totalorder %s18, 0
      %p45 = por %p43, %p44
      %s47 = sadd.s32 %s46, 1
      %p50 = scmp.eq.s32.totalorder %s12, 1
      %p51 = scmp.ne.s32.totalorder %s46, %s48
      %p52 = scmp.eq.s32.totalorder %s12, 0
      %p53 = por %p51, %p52
      %p54 = scmp.ne.s32.totalorder %s46, %s48
      %p55 = scmp.eq.s32.totalorder %s17, 1
      %p56 = por %p54, %p55
      %p57 = scmp.ne.s32.totalorder %s48, %s49
      %p58 = scmp.eq.s32.totalorder %s17, 0
      %p59 = por %p57, %p58
      %p60 = scmp.ne.s32.totalorder %s48, %s49
      %p61 = scmp.eq.s32.totalorder %s18, 1
      %p62 = por %p60, %p61
      %p64 = scmp.ne.s32.totalorder %s49, %s63
      %p65 = scmp.eq.s32.totalorder %s18, 0
      %p66 = por %p64, %p65
      %s68 = sadd.s32 %s67, 1
      %p71 = scmp.eq.s32.totalorder %s12, 1
      %p72 = scmp.ne.s32.totalorder %s67, %s69
      %p73 = scmp.eq.s32.totalorder %s12, 0
      %p74 = por %p72, %p73
      %p75 = scmp.ne.s32.totalorder %s67, %s69
      %p76 = scmp.eq.s32.totalorder %s17, 1
      %p77 = por %p75, %p76
      %p78 = scmp.ne.s32.totalorder %s69, %s70
      %p79 = scmp.eq.s32.totalorder %s17, 0
      %p80 = por %p78, %p79
      %p81 = scmp.ne.s32.totalorder %s69, %s70
      %p82 = scmp.eq.s32.totalorder %s18, 1
      %p83 = por %p81, %p82
      %p85 = scmp.ne.s32.totalorder %s70, %s84
      %p86 = scmp.eq.s32.totalorder %s18, 0
      %p87 = por %p85, %p86
      %s88 = ssub.s32 %s12, %s19
      %p89 = scmp.eq.s32.totalorder %s88, 0
      %s91 = sadd.s32 %s90, 1
      %s92 = scalar_select %p89, %s90, %s91
      %p95 = pneg %p89
      %p96 = scmp.eq.s32.totalorder %s12, 1
      %p97 = por %p95, %p96
      %p98 = scmp.ne.s32.totalorder %s90, %s93
      %p99 = scmp.eq.s32.totalorder %s12, 0
      %p100 = por %p98, %p99
      %p101 = scmp.ne.s32.totalorder %s90, %s93
      %p102 = scmp.eq.s32.totalorder %s17, 1
      %p103 = por %p101, %p102
      %p104 = scmp.ne.s32.totalorder %s93, %s94
      %p105 = scmp.eq.s32.totalorder %s17, 0
      %p106 = por %p104, %p105
      %p107 = scmp.ne.s32.totalorder %s93, %s94
      %p108 = scmp.eq.s32.totalorder %s18, 1
      %p109 = por %p107, %p108
      %p111 = scmp.ne.s32.totalorder %s94, %s110
      %p112 = scmp.eq.s32.totalorder %s18, 0
      %p113 = por %p111, %p112
      %p114 = scmp.le.s32.totalorder 1, %s12
      %p115 = scmp.lt.s32.totalorder %s12, 3
      %p116 = pnand %p114, %p115
      %p117 = pneg %p116
      // Predicated region
      $region9: #{tpu_custom_call.1} parent=5 // pred_check
        _
      $region10: #{tpu_custom_call.1} parent=5 // pred_check_branch
        %119 = sbr.rel (%p116) target = $region12
      $region11: #{tpu_custom_call.1} parent=5 // pred_region
        %s120 = ssub.s32 %s12, 1
        // Predicated region
        $region13: #{tpu_custom_call.1} parent=11 // pred_check
          %p121 = pneg %p59
        $region14: #{tpu_custom_call.1} parent=11 // pred_check_branch
          %123 = sbr.rel (%p121) target = $region16
        $region15: #{tpu_custom_call.1} parent=11 // pred_region
          _
        $region16: #{tpu_custom_call.1} parent=11 // pred_fallthru
          _
        // Predicated region
        $region17: #{tpu_custom_call.1} parent=11 // pred_check
          %p124 = pneg %p80
        $region18: #{tpu_custom_call.1} parent=11 // pred_check_branch
          %126 = sbr.rel (%p124) target = $region20
        $region19: #{tpu_custom_call.1} parent=11 // pred_region
          _
        $region20: #{tpu_custom_call.1} parent=11 // pred_fallthru
          _
      $region12: #{tpu_custom_call.1} parent=5 // pred_fallthru
        _
      %p127 = scmp.lt.s32.totalorder %s12, 2
      // Predicated region
      $region21: #{tpu_custom_call.1} parent=5 // pred_check
        %p128 = pneg %p127
      $region22: #{tpu_custom_call.1} parent=5 // pred_check_branch
        %130 = sbr.rel (%p128) target = $region24
      $region23: #{tpu_custom_call.1} parent=5 // pred_region
        // Predicated region
        $region25: #{tpu_custom_call.1} parent=23 // pred_check
          %p131 = pneg %p32
        $region26: #{tpu_custom_call.1} parent=23 // pred_check_branch
          %133 = sbr.rel (%p131) target = $region28
        $region27: #{tpu_custom_call.1} parent=23 // pred_region
          %p134 = scmp.lt.s32.totalorder %s12, 1
          %s135 = scalar_select %p134, %s12, 1
          %s136 = smul.addr %s135, 8
          %s137 = scalar_lea.vmem %s0, %s136
        $region28: #{tpu_custom_call.1} parent=23 // pred_fallthru
          _
      $region24: #{tpu_custom_call.1} parent=5 // pred_fallthru
        _
      %p138 = scmp.le.s32.totalorder 1, %s12
      %p139 = scmp.lt.s32.totalorder %s12, 3
      %p140 = pnand %p138, %p139
      %p141 = pneg %p140
      // Predicated region
      $region29: #{tpu_custom_call.1} parent=5 // pred_check
        _
      $region30: #{tpu_custom_call.1} parent=5 // pred_check_branch
        %143 = sbr.rel (%p140) target = $region32
      $region31: #{tpu_custom_call.1} parent=5 // pred_region
        %s144 = ssub.s32 %s12, 1
        %p145 = scmp.lt.s32.totalorder %s17, 1
        %s146 = scalar_select %p145, %s17, 1
        %s147 = smul.addr %s146, 8
        %s148 = scalar_lea.vmem %s0, %s147
        %p149 = pneg %p38
        %p150 = pneg %p35
        %p151 = pneg %p59
        %p152 = pneg %p56
        %p153 = pneg %p80
        %p154 = pneg %p77
        %p155 = pneg %p106
        %p156 = pneg %p103
        %s157 = sand.u32 %s93, 1
        %s158 = scalar_lea.sflag [#allocation3], %s157
        %s159 = sand.u32 %s93, 1
        %s160 = smul.addr %s159, 8
        %s161 = scalar_lea.vmem [#allocation2], %s160
        %p162 = scmp.lt.s32.totalorder %s17, 1
        %s163 = scalar_select %p162, %s17, 1
        %s164 = smul.addr %s163, 8
        %s165 = scalar_lea.vmem %s0, %s164
        %v166 = vld [vmem:[%s165] sm:$0xff]
        %167 = vadd.xlane.f32.xlu0 %v166
        %v168 = vpop.xlane.xlu0 %167
        %v169 = vrot.slane %v168, 4
        %v170 = vadd.f32 %v168, %v169
        %v171 = vrot.slane %v170, 2
        %v172 = vadd.f32 %v170, %v171
        %v173 = vrot.slane %v172, 1
        %v174 = vadd.f32 %v172, %v173
        %v175 = vmul.f32 %v166, %v166
        %176 = vadd.xlane.f32.xlu0 %v175
        %v177 = vpop.xlane.xlu0 %176
        %v178 = vrot.slane %v177, 4
        %v179 = vadd.f32 %v177, %v178
        %v180 = vrot.slane %v179, 2
        %v181 = vadd.f32 %v179, %v180
        %v182 = vrot.slane %v181, 1
        %v183 = vadd.f32 %v181, %v182
        %v184 = vrcp.pop 1024.0
        %v185 = vmul.f32 %v174, %v184
        %v186 = vmul.f32 %v185, 1024.0
        %v187 = vmul.f32 %v186, %v185
        %v188 = vsub.f32 %v183, %v187
        %v189 = vrcp.pop 1023.0
        %v190 = vmul.f32 %v188, %v189
        %v191 = vrsqrt.pop %v190
        %v192 = vld [vmem:[%s1] sm:$0xff]
        %v193 = vld [vmem:[%s2] sm:$0xff]
        %v194 = vmul.f32 %v192, %v191
        %v195 = vmul.f32 %v194, %v185
        %v196 = vsub.f32 %v193, %v195
        %198 = vset.pattern.permute.xlu0 0
        %199 = vperm.xlu0 %198, %v194
        %v200 = vpop.permute.xlu0 %199
        %v202 = vmul.f32 %v200, %v166
        %204 = vset.pattern.permute.xlu0 0
        %205 = vperm.xlu0 %204, %v196
        %v206 = vpop.permute.xlu0 %205
        %v208 = vadd.f32 %v202, %v206
        %209 = vst [vmem:[%s161] sm:$0xff] %v208
        %s210 = sand.u32 %s93, 1
        %s211 = scalar_lea.sflag [#allocation3], %s210
        %s212 = sand.u32 %s93, 1
        %s213 = smul.addr %s212, 8
        %s214 = scalar_lea.vmem [#allocation2], %s213
        // Predicated region
        $region33: #{tpu_custom_call.1} parent=31 // pred_check
          %p215 = pneg %p103
        $region34: #{tpu_custom_call.1} parent=31 // pred_check_branch
          %217 = sbr.rel (%p215) target = $region36
        $region35: #{tpu_custom_call.1} parent=31 // pred_region
          %s219 = ssub.s32 128, 128
          %220 = vsyncadd %s211, %s219
          %s221 = smul.addr %s17, 128
          %s222 = scalar_lea.hbm %s3, %s221
          %s224 = sshll.u32 %s214, 4
          %s225 = int_to_ptr.vmem [resolvable:$true] %s224
          %227 = dma.vmem_to_hbm [thread:$0]  %s225, 128, %s222, %s211
        $region36: #{tpu_custom_call.1} parent=31 // pred_fallthru
          _
      $region32: #{tpu_custom_call.1} parent=5 // pred_fallthru
        _
      %p228 = scmp.le.s32.totalorder 2, %s12
      // Predicated region
      $region37: #{tpu_custom_call.1} parent=5 // pred_check
        %p229 = pneg %p228
      $region38: #{tpu_custom_call.1} parent=5 // pred_check_branch
        %231 = sbr.rel (%p229) target = $region40
      $region39: #{tpu_custom_call.1} parent=5 // pred_region
        %s232 = ssub.s32 %s12, 2
        // Predicated region
        $region41: #{tpu_custom_call.1} parent=39 // pred_check
          %p233 = pneg %p109
        $region42: #{tpu_custom_call.1} parent=39 // pred_check_branch
          %235 = sbr.rel (%p233) target = $region44
        $region43: #{tpu_custom_call.1} parent=39 // pred_region
          %s236 = sand.u32 %s94, 1
          %s237 = scalar_lea.sflag [#allocation3], %s236
          %s238 = sand.u32 %s94, 1
          %s239 = smul.addr %s238, 8
          %s240 = scalar_lea.vmem [#allocation2], %s239
          %241 = dma.done %s237, 128
        $region44: #{tpu_custom_call.1} parent=39 // pred_fallthru
          _
      $region40: #{tpu_custom_call.1} parent=5 // pred_fallthru
        _
    $region6: #{tpu_custom_call.1} parent=1 // loop_footer
      %s16 = sadd.s32 1, %s12
    $region7: #{tpu_custom_call.1} parent=1 // loop_footer_branch
      %11 = sbr.rel target = $region3
    $region8: #{tpu_custom_call.1} parent=1 // loop_exit
      _
    %242 = vsyncpa [#allocation3], 1
    %s243 = scalar_lea.sflag [#allocation3], 1
    %244 = vsyncpa %s243, 1

</llo_original>
